<compile_context>
chip_gen: v5e
topology: v5e:2x2
jax: 0.10.0
libtpu: 0.0.40
codegen_flags: <defaults>
</compile_context>

<pallas_src>
import functools

import jax
import jax.numpy as jnp
from jax.experimental import pallas as pl
from jax.experimental.pallas import tpu as pltpu

LATENT_SIZE = 100
HIDDEN_SIZE = 256
IMAGE_SIZE = 28 * 28          # 784

K_PAD = 128                   # latent dim padded to one clean MXU pass
N_PAD = 896                   # output dim padded to 7 lanes * 128 (lane-dense)


def _round_up(n, m):
    return ((n + m - 1) // m) * m


def generator_kernel(x_ref, w1_ref, b1_ref, w2_ref, b2_ref, out_ref):
    # x_ref:  (bm, 128)   bf16  (zero-padded latent columns)
    # w1_ref: (128, 256)  bf16  (VMEM-resident across grid steps)
    # b1_ref: (1, 256)    f32
    # w2_ref: (256, 896)  bf16  (VMEM-resident across grid steps)
    # b2_ref: (1, 896)    f32   (zero-padded columns)
    # out_ref:(bm, 896)   bf16  (lane-dense store; wrapper slices to 784)
    h = jnp.dot(x_ref[...], w1_ref[...],
                preferred_element_type=jnp.float32) + b1_ref[...]
    z = jnp.dot(h.astype(jnp.bfloat16), w2_ref[...],
                preferred_element_type=jnp.float32) + b2_ref[...]
    # sigmoid: exp and reciprocal both go to the EUP (free VLIW slot);
    # kept in f32 so the same kernel is optimal on v5e (no bf16 VPU/EUP).
    sig = pl.reciprocal(1.0 + jnp.exp(-z), approx=True)
    out_ref[...] = sig.astype(out_ref.dtype)


def prepare_params(w1, b1, w2, b2):
    """One-time padding + bf16 cast of the weights (hoisted out of forward)."""
    w1_p = jnp.pad(w1, ((0, K_PAD - LATENT_SIZE), (0, 0))).astype(jnp.bfloat16)
    b1_p = b1.astype(jnp.float32).reshape(1, HIDDEN_SIZE)
    w2_p = jnp.pad(w2, ((0, 0), (0, N_PAD - IMAGE_SIZE))).astype(jnp.bfloat16)
    b2_p = jnp.pad(b2.reshape(1, IMAGE_SIZE),
                   ((0, 0), (0, N_PAD - IMAGE_SIZE))).astype(jnp.float32)
    return w1_p, b1_p, w2_p, b2_p


@functools.partial(jax.jit, static_argnames=("block_m",))
def generator_forward(x, w1_p, b1_p, w2_p, b2_p, *, block_m=1024):
    """Forward pass. Params must come from prepare_params()."""
    batch = x.shape[0]

    # Batch tile: multiple of 8 (sublane), capped at block_m. For batches
    # larger than block_m the grid has >= 2 steps, so the "parallel" batch
    # axis spans both v7x TensorCores.
    bm = min(block_m, _round_up(batch, 8))
    padded_batch = _round_up(batch, bm)
    grid = (padded_batch // bm,)

    # Zero-pad batch rows and latent columns; cast input to bf16 (zero padding
    # in bf16 is exact, so the first 784 output columns are unaffected).
    x_p = jnp.pad(x.astype(jnp.bfloat16),
                  ((0, padded_batch - batch), (0, K_PAD - LATENT_SIZE)))

    flops = 2 * padded_batch * (K_PAD * HIDDEN_SIZE + HIDDEN_SIZE * N_PAD)
    bytes_accessed = (
        2 * x_p.size                      # bf16 input
        + 2 * w1_p.size + 2 * w2_p.size   # bf16 weights
        + 4 * b1_p.size + 4 * b2_p.size   # f32 biases
        + 2 * padded_batch * N_PAD        # bf16 output
    )

    out_padded = pl.pallas_call(
        generator_kernel,
        out_shape=jax.ShapeDtypeStruct((padded_batch, N_PAD), jnp.bfloat16),
        grid=grid,
        in_specs=[
            pl.BlockSpec((bm, K_PAD), lambda i: (i, 0)),              # x tile
            pl.BlockSpec((K_PAD, HIDDEN_SIZE), lambda i: (0, 0)),     # w1 (resident)
            pl.BlockSpec((1, HIDDEN_SIZE), lambda i: (0, 0)),         # b1 (resident)
            pl.BlockSpec((HIDDEN_SIZE, N_PAD), lambda i: (0, 0)),     # w2 (resident)
            pl.BlockSpec((1, N_PAD), lambda i: (0, 0)),               # b2 (resident)
        ],
        out_specs=pl.BlockSpec((bm, N_PAD), lambda i: (i, 0)),
        compiler_params=pltpu.CompilerParams(
            dimension_semantics=("parallel",)),
        cost_estimate=pl.CostEstimate(
            flops=flops,
            transcendentals=padded_batch * N_PAD,
            bytes_accessed=bytes_accessed),
    )(x_p, w1_p, b1_p, w2_p, b2_p)

    # Slice back to the PyTorch-visible shape (batch, 784). Consumers that
    # can accept the (batch, 896) padded bf16 slab should use out_padded
    # directly to skip this extra output pass.
    return out_padded[:batch, :IMAGE_SIZE]


def init_params(key):
    # Deterministic PyTorch-style init: U(-1/sqrt(fan_in), 1/sqrt(fan_in)).
    k1, k2, k3, k4 = jax.random.split(key, 4)
    s1 = 1.0 / jnp.sqrt(LATENT_SIZE)
    s2 = 1.0 / jnp.sqrt(HIDDEN_SIZE)
    w1 = jax.random.uniform(k1, (LATENT_SIZE, HIDDEN_SIZE), jnp.float32, -s1, s1)
    b1 = jax.random.uniform(k2, (1, HIDDEN_SIZE), jnp.float32, -s1, s1)
    w2 = jax.random.uniform(k3, (HIDDEN_SIZE, IMAGE_SIZE), jnp.float32, -s2, s2)
    b2 = jax.random.uniform(k4, (1, IMAGE_SIZE), jnp.float32, -s2, s2)
    return w1, b1, w2, b2


if __name__ == "__main__":
    key = jax.random.PRNGKey(0)
    k_params, k_x = jax.random.split(key)
    w1, b1, w2, b2 = init_params(k_params)

    # One-time weight prep (padding + bf16 cast), hoisted out of the forward.
    params = prepare_params(w1, b1, w2, b2)

    batch = 8
    x = jax.random.normal(k_x, (batch, LATENT_SIZE), jnp.float32)

    out = generator_forward(x, *params)
    out = jax.block_until_ready(out)

    # Reference check against plain f32 JAX. Tolerance accounts for the
    # bf16-input / f32-accumulate matmuls and the bf16 output store.
    ref = jax.nn.sigmoid((x @ w1 + b1) @ w2 + b2)
    assert out.shape == (batch, IMAGE_SIZE)
    err = float(jnp.max(jnp.abs(out.astype(jnp.float32) - ref)))
    assert err < 2e-2, err

    print("KERNEL_OK")
</pallas_src>

<mosaic_0001>
module attributes {stable_mosaic.version = 11 : i64} {
  func.func @generator_kernel(%arg0: i32, %arg1: memref<8x128xbf16, #tpu.memory_space<vmem>>, %arg2: memref<128x256xbf16, #tpu.memory_space<vmem>>, %arg3: memref<1x256xf32, #tpu.memory_space<vmem>>, %arg4: memref<256x896xbf16, #tpu.memory_space<vmem>>, %arg5: memref<1x896xf32, #tpu.memory_space<vmem>>, %arg6: memref<8x896xbf16, #tpu.memory_space<vmem>>) attributes {dimension_semantics = [#tpu.dimension_semantics<parallel>], iteration_bounds = array<i64: 1>, scalar_prefetch = 0 : i64, scratch_operands = 0 : i64, tpu.core_type = #tpu.core_type<tc>, window_params = [{transform_indices = @transform_0, window_bounds = array<i64: 8, 128>}, {pipeline_mode = #tpu.pipeline_mode<synchronous>, transform_indices = @transform_1, window_bounds = array<i64: 128, 256>}, {pipeline_mode = #tpu.pipeline_mode<synchronous>, transform_indices = @transform_2, window_bounds = array<i64: 1, 256>}, {pipeline_mode = #tpu.pipeline_mode<synchronous>, transform_indices = @transform_3, window_bounds = array<i64: 256, 896>}, {pipeline_mode = #tpu.pipeline_mode<synchronous>, transform_indices = @transform_4, window_bounds = array<i64: 1, 896>}, {transform_indices = @transform_5, window_bounds = array<i64: 8, 896>}]} {
    %c0 = arith.constant 0 : index
    %c0_0 = arith.constant 0 : index
    %0 = vector.load %arg1[%c0, %c0_0] : memref<8x128xbf16, #tpu.memory_space<vmem>>, vector<8x128xbf16>
    %c0_1 = arith.constant 0 : index
    %c0_2 = arith.constant 0 : index
    %1 = vector.load %arg2[%c0_1, %c0_2] : memref<128x256xbf16, #tpu.memory_space<vmem>>, vector<128x256xbf16>
    %cst = arith.constant dense<0.000000e+00> : vector<8x256xf32>
    %2 = tpu.matmul %0, %1, %cst {dimension_numbers = #tpu.dot_dimension_numbers<[1], [0], [0], [1], [0, 0, 1, 1], [], []>} : vector<8x128xbf16>, vector<128x256xbf16>, vector<8x256xf32> -> vector<8x256xf32>
    %c0_3 = arith.constant 0 : index
    %c0_4 = arith.constant 0 : index
    %3 = vector.load %arg3[%c0_3, %c0_4] : memref<1x256xf32, #tpu.memory_space<vmem>>, vector<1x256xf32>
    %4 = vector.broadcast %3 : vector<1x256xf32> to vector<8x256xf32>
    %5 = arith.addf %2, %4 : vector<8x256xf32>
    %6 = arith.truncf %5 : vector<8x256xf32> to vector<8x256xbf16>
    %c0_5 = arith.constant 0 : index
    %c0_6 = arith.constant 0 : index
    %7 = vector.load %arg4[%c0_5, %c0_6] : memref<256x896xbf16, #tpu.memory_space<vmem>>, vector<256x896xbf16>
    %cst_7 = arith.constant dense<0.000000e+00> : vector<8x896xf32>
    %8 = tpu.matmul %6, %7, %cst_7 {dimension_numbers = #tpu.dot_dimension_numbers<[1], [0], [0], [1], [0, 0, 1, 1], [], []>} : vector<8x256xbf16>, vector<256x896xbf16>, vector<8x896xf32> -> vector<8x896xf32>
    %c0_8 = arith.constant 0 : index
    %c0_9 = arith.constant 0 : index
    %9 = vector.load %arg5[%c0_8, %c0_9] : memref<1x896xf32, #tpu.memory_space<vmem>>, vector<1x896xf32>
    %10 = vector.broadcast %9 : vector<1x896xf32> to vector<8x896xf32>
    %11 = arith.addf %8, %10 : vector<8x896xf32>
    %cst_10 = arith.constant 0.000000e+00 : f32
    %12 = vector.broadcast %cst_10 : f32 to vector<8x896xf32>
    %13 = arith.subf %12, %11 : vector<8x896xf32>
    %14 = math.exp %13 : vector<8x896xf32>
    %cst_11 = arith.constant 1.000000e+00 : f32
    %15 = vector.broadcast %cst_11 : f32 to vector<8x896xf32>
    %16 = arith.addf %15, %14 : vector<8x896xf32>
    %17 = tpu.reciprocal %16 {approx = true} : vector<8x896xf32> -> vector<8x896xf32>
    %18 = arith.truncf %17 : vector<8x896xf32> to vector<8x896xbf16>
    %c0_12 = arith.constant 0 : index
    %c0_13 = arith.constant 0 : index
    %19 = vector.load %arg6[%c0_12, %c0_13] : memref<8x896xbf16, #tpu.memory_space<vmem>>, vector<8x896xbf16>
    tpu.vector_store %arg6[%c0_12, %c0_13], %18 {strides = array<i32>} : memref<8x896xbf16, #tpu.memory_space<vmem>>, vector<8x896xbf16>,
    return
  }
  func.func @transform_0(%arg0: i32) -> (i32, i32) {
    %c0_i32 = arith.constant 0 : i32
    %c0_i32_0 = arith.constant 0 : i32
    return %arg0, %c0_i32 : i32, i32
  }
  func.func @transform_1(%arg0: i32) -> (i32, i32) {
    %c0_i32 = arith.constant 0 : i32
    %c0_i32_0 = arith.constant 0 : i32
    %c0_i32_1 = arith.constant 0 : i32
    return %c0_i32, %c0_i32_0 : i32, i32
  }
  func.func @transform_2(%arg0: i32) -> (i32, i32) {
    %c0_i32 = arith.constant 0 : i32
    %c0_i32_0 = arith.constant 0 : i32
    %c0_i32_1 = arith.constant 0 : i32
    return %c0_i32, %c0_i32_0 : i32, i32
  }
  func.func @transform_3(%arg0: i32) -> (i32, i32) {
    %c0_i32 = arith.constant 0 : i32
    %c0_i32_0 = arith.constant 0 : i32
    %c0_i32_1 = arith.constant 0 : i32
    return %c0_i32, %c0_i32_0 : i32, i32
  }
  func.func @transform_4(%arg0: i32) -> (i32, i32) {
    %c0_i32 = arith.constant 0 : i32
    %c0_i32_0 = arith.constant 0 : i32
    %c0_i32_1 = arith.constant 0 : i32
    return %c0_i32, %c0_i32_0 : i32, i32
  }
  func.func @transform_5(%arg0: i32) -> (i32, i32) {
    %c0_i32 = arith.constant 0 : i32
    %c0_i32_0 = arith.constant 0 : i32
    return %arg0, %c0_i32 : i32, i32
  }
}

</mosaic_0001>

<llo_original>
// kernel: generator_forward.1
$region0: #{generator_forward.1}
  #allocation0 [shape = 'u32[]', space=smem, size = 0x4, offset = 0x4, fixed_abs, tag = 'smem constant byte address 0x4 - core index']
  #allocation1 [shape = 'u32[72,128]{1,0:T(1,128)}', space=vmem, size = 0x9000, scoped, tag = 'internal scratch']
  %s0 = inlined_call_operand.vmem [shape: bf16[8,128], index: 0, kind: input, shape index: {}]
  %s1 = inlined_call_operand.hbm [shape: bf16[128,256], index: 1, kind: input, shape index: {}]
  %s2 = inlined_call_operand.vmem [shape: f32[1,256], index: 2, kind: input, shape index: {}]
  %s3 = inlined_call_operand.hbm [shape: bf16[256,896], index: 3, kind: input, shape index: {}]
  %s4 = inlined_call_operand.vmem [shape: f32[1,896], index: 4, kind: input, shape index: {}]
  %s5 = inlined_call_operand.hbm [shape: bf16[8,896], index: 5, kind: output, shape index: {}]
  %s6 = sld [smem:[#allocation0]]
  $region38: #{generator_forward.1} parent=0
    _
  %s8 = ssub.s32 1, %s6
  %s9 = scalar_select 0, %s8, %s6
  $region1: #{generator_forward.1} parent=0
    #allocation2 [shape = 'u8[65536]{0}', space=vmem, size = 0x10000, scoped, tag = 'input window, operand 1, single buffered']
    #allocation3 [shape = 's32[1]{0}', space=sflag, size = 0x4, scoped, tag = 'scoped memory for generator_forward.1']
    #allocation4 [shape = 's32[1]{0}', space=sflag, size = 0x4, scoped, tag = 'scoped memory for generator_forward.1']
    #allocation5 [shape = 'u8[458752]{0}', space=vmem, size = 0x70000, scoped, tag = 'input window, operand 3, single buffered']
    #allocation6 [shape = 's32[1]{0}', space=sflag, size = 0x4, scoped, tag = 'scoped memory for generator_forward.1']
    #allocation7 [shape = 'u8[14336]{0}', space=vmem, size = 0x3800, scoped, tag = 'output window, operand 0, single buffered']
    %10 = vsyncpa [#allocation3], 0
    %11 = vsyncpa [#allocation6], 0
    %12 = vsyncpa [#allocation4], 0
    // Predicated region
    $region2: #{generator_forward.1} parent=1 // pred_check
      _
    $region3: #{generator_forward.1} parent=1 // pred_check_branch
      %14 = sbr.rel (0) target = $region5
    $region4: #{generator_forward.1} parent=1 // pred_region
      _
    $region5: #{generator_forward.1} parent=1 // pred_fallthru
      _
    // Predicated region
    $region6: #{generator_forward.1} parent=1 // pred_check
      _
    $region7: #{generator_forward.1} parent=1 // pred_check_branch
      %16 = sbr.rel (0) target = $region9
    $region8: #{generator_forward.1} parent=1 // pred_region
      %18 = vsyncadd [#allocation3], 0
      %s19 = sshll.u32 %s1, 4
      %s20 = int_to_ptr.hbm [resolvable:$true] %s19
      %s21 = sshll.u32 [#allocation2], 4
      %s22 = int_to_ptr.vmem [resolvable:$true] %s21
      %27 = dma.hbm_to_vmem [thread:$0]  %s20, 2048, %s22, [#allocation3], 128, 128, 8
    $region9: #{generator_forward.1} parent=1 // pred_fallthru
      _
    // Predicated region
    $region10: #{generator_forward.1} parent=1 // pred_check
      _
    $region11: #{generator_forward.1} parent=1 // pred_check_branch
      %29 = sbr.rel (0) target = $region13
    $region12: #{generator_forward.1} parent=1 // pred_region
      _
    $region13: #{generator_forward.1} parent=1 // pred_fallthru
      _
    // Predicated region
    $region14: #{generator_forward.1} parent=1 // pred_check
      _
    $region15: #{generator_forward.1} parent=1 // pred_check_branch
      %31 = sbr.rel (0) target = $region17
    $region16: #{generator_forward.1} parent=1 // pred_region
      %33 = vsyncadd [#allocation6], 0
      %s34 = sshll.u32 %s3, 4
      %s35 = int_to_ptr.hbm [resolvable:$true] %s34
      %s36 = sshll.u32 [#allocation5], 4
      %s37 = int_to_ptr.vmem [resolvable:$true] %s36
      %42 = dma.hbm_to_vmem [thread:$0]  %s35, 14336, %s37, [#allocation6], 448, 448, 28
    $region17: #{generator_forward.1} parent=1 // pred_fallthru
      _
    // Predicated region
    $region18: #{generator_forward.1} parent=1 // pred_check
      _
    $region19: #{generator_forward.1} parent=1 // pred_check_branch
      %44 = sbr.rel (0) target = $region21
    $region20: #{generator_forward.1} parent=1 // pred_region
      _
    $region21: #{generator_forward.1} parent=1 // pred_fallthru
      _
    // Predicated region
    $region22: #{generator_forward.1} parent=1 // pred_check
      _
    $region23: #{generator_forward.1} parent=1 // pred_check_branch
      %46 = sbr.rel (0) target = $region25
    $region24: #{generator_forward.1} parent=1 // pred_region
      %48 = dma.done [#allocation3], 2048
    $region25: #{generator_forward.1} parent=1 // pred_fallthru
      _
    // Predicated region
    $region26: #{generator_forward.1} parent=1 // pred_check
      _
    $region27: #{generator_forward.1} parent=1 // pred_check_branch
      %50 = sbr.rel (0) target = $region29
    $region28: #{generator_forward.1} parent=1 // pred_region
      %52 = dma.done [#allocation6], 14336
    $region29: #{generator_forward.1} parent=1 // pred_fallthru
      _
    %v53 = vld [vmem:[%s0] sm:$0xf]
    %v54 = vld [vmem:[#allocation2] sm:$0xff]
    %v55 = vld [vmem:[#allocation2 + $0x8] sm:$0xff]
    %v56 = vld [vmem:[#allocation2 + $0x10] sm:$0xff]
    %v57 = vld [vmem:[#allocation2 + $0x18] sm:$0xff]
    %v58 = vld [vmem:[#allocation2 + $0x20] sm:$0xff]
    %v59 = vld [vmem:[#allocation2 + $0x28] sm:$0xff]
    %v60 = vld [vmem:[#allocation2 + $0x30] sm:$0xff]
    %v61 = vld [vmem:[#allocation2 + $0x38] sm:$0xff]
    %v62 = vld [vmem:[#allocation2 + $0x40] sm:$0xff]
    %v63 = vld [vmem:[#allocation2 + $0x48] sm:$0xff]
    %v64 = vld [vmem:[#allocation2 + $0x50] sm:$0xff]
    %v65 = vld [vmem:[#allocation2 + $0x58] sm:$0xff]
    %v66 = vld [vmem:[#allocation2 + $0x60] sm:$0xff]
    %v67 = vld [vmem:[#allocation2 + $0x68] sm:$0xff]
    %v68 = vld [vmem:[#allocation2 + $0x70] sm:$0xff]
    %v69 = vld [vmem:[#allocation2 + $0x78] sm:$0xff]
    %v70 = vld [vmem:[%s2] sm:$0x3]
    %v72 = vperm.slane %v70, 0
    %v73 = vperm.slane %v70, 1
    %v92 = vunpack.c.l.b16 %v54
    %v93 = vunpack.c.h.b16 %v54
    %v94 = vunpack.c.l.b16 %v55
    %v95 = vunpack.c.h.b16 %v55
    %v96 = vunpack.c.l.b16 %v56
    %v97 = vunpack.c.h.b16 %v56
    %v98 = vunpack.c.l.b16 %v57
    %v99 = vunpack.c.h.b16 %v57
    %v100 = vunpack.c.l.b16 %v58
    %v101 = vunpack.c.h.b16 %v58
    %v102 = vunpack.c.l.b16 %v59
    %v103 = vunpack.c.h.b16 %v59
    %v104 = vunpack.c.l.b16 %v60
    %v105 = vunpack.c.h.b16 %v60
    %v106 = vunpack.c.l.b16 %v61
    %v107 = vunpack.c.h.b16 %v61
    %v108 = vunpack.c.l.b16 %v62
    %v109 = vunpack.c.h.b16 %v62
    %v110 = vunpack.c.l.b16 %v63
    %v111 = vunpack.c.h.b16 %v63
    %v112 = vunpack.c.l.b16 %v64
    %v113 = vunpack.c.h.b16 %v64
    %v114 = vunpack.c.l.b16 %v65
    %v115 = vunpack.c.h.b16 %v65
    %v116 = vunpack.c.l.b16 %v66
    %v117 = vunpack.c.h.b16 %v66
    %v118 = vunpack.c.l.b16 %v67
    %v119 = vunpack.c.h.b16 %v67
    %v120 = vunpack.c.l.b16 %v68
    %v121 = vunpack.c.h.b16 %v68
    %v122 = vunpack.c.l.b16 %v69
    %v123 = vunpack.c.h.b16 %v69
    %v124 = vpack.c.b16 %v94, %v92
    %v125 = vpack.c.b16 %v95, %v93
    %v126 = vpack.c.b16 %v98, %v96
    %v127 = vpack.c.b16 %v99, %v97
    %v128 = vpack.c.b16 %v102, %v100
    %v129 = vpack.c.b16 %v103, %v101
    %v130 = vpack.c.b16 %v106, %v104
    %v131 = vpack.c.b16 %v107, %v105
    %v132 = vpack.c.b16 %v110, %v108
    %v133 = vpack.c.b16 %v111, %v109
    %v134 = vpack.c.b16 %v114, %v112
    %v135 = vpack.c.b16 %v115, %v113
    %v136 = vpack.c.b16 %v118, %v116
    %v137 = vpack.c.b16 %v119, %v117
    %v138 = vpack.c.b16 %v122, %v120
    %v139 = vpack.c.b16 %v123, %v121
    %156 = vmatpush.bf16.msra.mxu0 %v138
    %157 = vmatpush.bf16.msra.mxu0 %v136
    %158 = vmatpush.bf16.msra.mxu0 %v134
    %159 = vmatpush.bf16.msra.mxu0 %v132
    %160 = vmatpush.bf16.msra.mxu0 %v130
    %161 = vmatpush.bf16.msra.mxu0 %v128
    %162 = vmatpush.bf16.msra.mxu0 %v126
    %163 = vmatpush.bf16.msra.mxu0 %v124
    %164 = vmatmul.bf16.gmra.mxu0 %v53
    %v165 = vpop.f32.mrf.mxu0
    %v166 = vadd.f32 %v72, %v165
    %v167 = vpop.f32.mrf.mxu0
    %168 = vdwg.mxu0
    %169 = vmatpush.bf16.msra.mxu0 %v139
    %170 = vmatpush.bf16.msra.mxu0 %v137
    %171 = vmatpush.bf16.msra.mxu0 %v135
    %172 = vmatpush.bf16.msra.mxu0 %v133
    %173 = vmatpush.bf16.msra.mxu0 %v131
    %174 = vmatpush.bf16.msra.mxu0 %v129
    %175 = vmatpush.bf16.msra.mxu0 %v127
    %176 = vmatpush.bf16.msra.mxu0 %v125
    %177 = vmatmul.bf16.gmra.mxu0 %v53
    %v178 = vpop.f32.mrf.mxu0
    %v179 = vadd.f32 %v73, %v178
    %v180 = vpop.f32.mrf.mxu0
    %181 = vdwg.mxu0
    %v182 = vpack.c.bf16 %v166, %v166
    %v183 = vpack.c.bf16 %v179, %v179
    %v184 = vld [vmem:[#allocation5] sm:$0xff]
    %v185 = vld [vmem:[#allocation5 + $0x8] sm:$0xff]
    %v186 = vld [vmem:[#allocation5 + $0x10] sm:$0xff]
    %v187 = vld [vmem:[#allocation5 + $0x18] sm:$0xf]
    %v188 = vld [vmem:[#allocation5 + $0x1c] sm:$0xff]
    %v189 = vld [vmem:[#allocation5 + $0x24] sm:$0xff]
    %v190 = vld [vmem:[#allocation5 + $0x2c] sm:$0xff]
    %v191 = vld [vmem:[#allocation5 + $0x34] sm:$0xf]
    %v192 = vld [vmem:[#allocation5 + $0x38] sm:$0xff]
    %v193 = vld [vmem:[#allocation5 + $0x40] sm:$0xff]
    %v194 = vld [vmem:[#allocation5 + $0x48] sm:$0xff]
    %v195 = vld [vmem:[#allocation5 + $0x50] sm:$0xf]
    %v196 = vld [vmem:[#allocation5 + $0x54] sm:$0xff]
    %v197 = vld [vmem:[#allocation5 + $0x5c] sm:$0xff]
    %v198 = vld [vmem:[#allocation5 + $0x64] sm:$0xff]
    %v199 = vld [vmem:[#allocation5 + $0x6c] sm:$0xf]
    %v200 = vld [vmem:[#allocation5 + $0x70] sm:$0xff]
    %v201 = vld [vmem:[#allocation5 + $0x78] sm:$0xff]
    %v202 = vld [vmem:[#allocation5 + $0x80] sm:$0xff]
    %v203 = vld [vmem:[#allocation5 + $0x88] sm:$0xf]
    %v204 = vld [vmem:[#allocation5 + $0x8c] sm:$0xff]
    %v205 = vld [vmem:[#allocation5 + $0x94] sm:$0xff]
    %v206 = vld [vmem:[#allocation5 + $0x9c] sm:$0xff]
    %v207 = vld [vmem:[#allocation5 + $0xa4] sm:$0xf]
    %v208 = vld [vmem:[#allocation5 + $0xa8] sm:$0xff]
    %v209 = vld [vmem:[#allocation5 + $0xb0] sm:$0xff]
    %v210 = vld [vmem:[#allocation5 + $0xb8] sm:$0xff]
    %v211 = vld [vmem:[#allocation5 + $0xc0] sm:$0xf]
    %v212 = vld [vmem:[#allocation5 + $0xc4] sm:$0xff]
    %v213 = vld [vmem:[#allocation5 + $0xcc] sm:$0xff]
    %v214 = vld [vmem:[#allocation5 + $0xd4] sm:$0xff]
    %v215 = vld [vmem:[#allocation5 + $0xdc] sm:$0xf]
    %v216 = vld [vmem:[#allocation5 + $0xe0] sm:$0xff]
    %v217 = vld [vmem:[#allocation5 + $0xe8] sm:$0xff]
    %v218 = vld [vmem:[#allocation5 + $0xf0] sm:$0xff]
    %v219 = vld [vmem:[#allocation5 + $0xf8] sm:$0xf]
    %v220 = vld [vmem:[#allocation5 + $0xfc] sm:$0xff]
    %v221 = vld [vmem:[#allocation5 + $0x104] sm:$0xff]
    %v222 = vld [vmem:[#allocation5 + $0x10c] sm:$0xff]
    %v223 = vld [vmem:[#allocation5 + $0x114] sm:$0xf]
    %v224 = vld [vmem:[#allocation5 + $0x118] sm:$0xff]
    %v225 = vld [vmem:[#allocation5 + $0x120] sm:$0xff]
    %v226 = vld [vmem:[#allocation5 + $0x128] sm:$0xff]
    %v227 = vld [vmem:[#allocation5 + $0x130] sm:$0xf]
    %v228 = vld [vmem:[#allocation5 + $0x134] sm:$0xff]
    %v229 = vld [vmem:[#allocation5 + $0x13c] sm:$0xff]
    %v230 = vld [vmem:[#allocation5 + $0x144] sm:$0xff]
    %v231 = vld [vmem:[#allocation5 + $0x14c] sm:$0xf]
    %v232 = vld [vmem:[#allocation5 + $0x150] sm:$0xff]
    %v233 = vld [vmem:[#allocation5 + $0x158] sm:$0xff]
    %v234 = vld [vmem:[#allocation5 + $0x160] sm:$0xff]
    %v235 = vld [vmem:[#allocation5 + $0x168] sm:$0xf]
    %v236 = vld [vmem:[#allocation5 + $0x16c] sm:$0xff]
    %v237 = vld [vmem:[#allocation5 + $0x174] sm:$0xff]
    %v238 = vld [vmem:[#allocation5 + $0x17c] sm:$0xff]
    %v239 = vld [vmem:[#allocation5 + $0x184] sm:$0xf]
    %v240 = vld [vmem:[#allocation5 + $0x188] sm:$0xff]
    %v241 = vld [vmem:[#allocation5 + $0x190] sm:$0xff]
    %v242 = vld [vmem:[#allocation5 + $0x198] sm:$0xff]
    %v243 = vld [vmem:[#allocation5 + $0x1a0] sm:$0xf]
    %v244 = vld [vmem:[#allocation5 + $0x1a4] sm:$0xff]
    %v245 = vld [vmem:[#allocation5 + $0x1ac] sm:$0xff]
    %v246 = vld [vmem:[#allocation5 + $0x1b4] sm:$0xff]
    %v247 = vld [vmem:[#allocation5 + $0x1bc] sm:$0xf]
    %v248 = vld [vmem:[#allocation5 + $0x1c0] sm:$0xff]
    %v249 = vld [vmem:[#allocation5 + $0x1c8] sm:$0xff]
    %v250 = vld [vmem:[#allocation5 + $0x1d0] sm:$0xff]
    %v251 = vld [vmem:[#allocation5 + $0x1d8] sm:$0xf]
    %v252 = vld [vmem:[#allocation5 + $0x1dc] sm:$0xff]
    %v253 = vld [vmem:[#allocation5 + $0x1e4] sm:$0xff]
    %v254 = vld [vmem:[#allocation5 + $0x1ec] sm:$0xff]
    %v255 = vld [vmem:[#allocation5 + $0x1f4] sm:$0xf]
    %v256 = vld [vmem:[#allocation5 + $0x1f8] sm:$0xff]
    %v257 = vld [vmem:[#allocation5 + $0x200] sm:$0xff]
    %v258 = vld [vmem:[#allocation5 + $0x208] sm:$0xff]
    %v259 = vld [vmem:[#allocation5 + $0x210] sm:$0xf]
    %v260 = vld [vmem:[#allocation5 + $0x214] sm:$0xff]
    %v261 = vld [vmem:[#allocation5 + $0x21c] sm:$0xff]
    %v262 = vld [vmem:[#allocation5 + $0x224] sm:$0xff]
    %v263 = vld [vmem:[#allocation5 + $0x22c] sm:$0xf]
    %v264 = vld [vmem:[#allocation5 + $0x230] sm:$0xff]
    %v265 = vld [vmem:[#allocation5 + $0x238] sm:$0xff]
    %v266 = vld [vmem:[#allocation5 + $0x240] sm:$0xff]
    %v267 = vld [vmem:[#allocation5 + $0x248] sm:$0xf]
    %v268 = vld [vmem:[#allocation5 + $0x24c] sm:$0xff]
    %v269 = vld [vmem:[#allocation5 + $0x254] sm:$0xff]
    %v270 = vld [vmem:[#allocation5 + $0x25c] sm:$0xff]
    %v271 = vld [vmem:[#allocation5 + $0x264] sm:$0xf]
    %v272 = vld [vmem:[#allocation5 + $0x268] sm:$0xff]
    %v273 = vld [vmem:[#allocation5 + $0x270] sm:$0xff]
    %v274 = vld [vmem:[#allocation5 + $0x278] sm:$0xff]
    %v275 = vld [vmem:[#allocation5 + $0x280] sm:$0xf]
    %v276 = vld [vmem:[#allocation5 + $0x284] sm:$0xff]
    %v277 = vld [vmem:[#allocation5 + $0x28c] sm:$0xff]
    %v278 = vld [vmem:[#allocation5 + $0x294] sm:$0xff]
    %v279 = vld [vmem:[#allocation5 + $0x29c] sm:$0xf]
    %v280 = vld [vmem:[#allocation5 + $0x2a0] sm:$0xff]
    %v281 = vld [vmem:[#allocation5 + $0x2a8] sm:$0xff]
    %v282 = vld [vmem:[#allocation5 + $0x2b0] sm:$0xff]
    %v283 = vld [vmem:[#allocation5 + $0x2b8] sm:$0xf]
    %v284 = vld [vmem:[#allocation5 + $0x2bc] sm:$0xff]
    %v285 = vld [vmem:[#allocation5 + $0x2c4] sm:$0xff]
    %v286 = vld [vmem:[#allocation5 + $0x2cc] sm:$0xff]
    %v287 = vld [vmem:[#allocation5 + $0x2d4] sm:$0xf]
    %v288 = vld [vmem:[#allocation5 + $0x2d8] sm:$0xff]
    %v289 = vld [vmem:[#allocation5 + $0x2e0] sm:$0xff]
    %v290 = vld [vmem:[#allocation5 + $0x2e8] sm:$0xff]
    %v291 = vld [vmem:[#allocation5 + $0x2f0] sm:$0xf]
    %v292 = vld [vmem:[#allocation5 + $0x2f4] sm:$0xff]
    %v293 = vld [vmem:[#allocation5 + $0x2fc] sm:$0xff]
    %v294 = vld [vmem:[#allocation5 + $0x304] sm:$0xff]
    %v295 = vld [vmem:[#allocation5 + $0x30c] sm:$0xf]
    %v296 = vld [vmem:[#allocation5 + $0x310] sm:$0xff]
    %v297 = vld [vmem:[#allocation5 + $0x318] sm:$0xff]
    %v298 = vld [vmem:[#allocation5 + $0x320] sm:$0xff]
    %v299 = vld [vmem:[#allocation5 + $0x328] sm:$0xf]
    %v300 = vld [vmem:[#allocation5 + $0x32c] sm:$0xff]
    %v301 = vld [vmem:[#allocation5 + $0x334] sm:$0xff]
    %v302 = vld [vmem:[#allocation5 + $0x33c] sm:$0xff]
    %v303 = vld [vmem:[#allocation5 + $0x344] sm:$0xf]
    %v304 = vld [vmem:[#allocation5 + $0x348] sm:$0xff]
    %v305 = vld [vmem:[#allocation5 + $0x350] sm:$0xff]
    %v306 = vld [vmem:[#allocation5 + $0x358] sm:$0xff]
    %v307 = vld [vmem:[#allocation5 + $0x360] sm:$0xf]
    %v308 = vld [vmem:[#allocation5 + $0x364] sm:$0xff]
    %v309 = vld [vmem:[#allocation5 + $0x36c] sm:$0xff]
    %v310 = vld [vmem:[#allocation5 + $0x374] sm:$0xff]
    %v311 = vld [vmem:[#allocation5 + $0x37c] sm:$0xf]
    %v312 = vld [vmem:[%s4] sm:$0xff]
    %v314 = vperm.slane %v312, 0
    %v315 = vperm.slane %v312, 1
    %v316 = vperm.slane %v312, 2
    %v317 = vperm.slane %v312, 3
    %v318 = vperm.slane %v312, 4
    %v319 = vperm.slane %v312, 5
    %v320 = vperm.slane %v312, 6
    %v456 = vunpack.c.l.b16 %v184
    %v457 = vunpack.c.h.b16 %v184
    %v458 = vunpack.c.l.b16 %v185
    %v459 = vunpack.c.h.b16 %v185
    %v460 = vunpack.c.l.b16 %v186
    %v461 = vunpack.c.h.b16 %v186
    %v462 = vunpack.c.l.b16 %v187
    %v463 = vunpack.c.l.b16 %v188
    %v464 = vunpack.c.h.b16 %v188
    %v465 = vunpack.c.l.b16 %v189
    %v466 = vunpack.c.h.b16 %v189
    %v467 = vunpack.c.l.b16 %v190
    %v468 = vunpack.c.h.b16 %v190
    %v469 = vunpack.c.l.b16 %v191
    %v470 = vunpack.c.l.b16 %v192
    %v471 = vunpack.c.h.b16 %v192
    %v472 = vunpack.c.l.b16 %v193
    %v473 = vunpack.c.h.b16 %v193
    %v474 = vunpack.c.l.b16 %v194
    %v475 = vunpack.c.h.b16 %v194
    %v476 = vunpack.c.l.b16 %v195
    %v477 = vunpack.c.l.b16 %v196
    %v478 = vunpack.c.h.b16 %v196
    %v479 = vunpack.c.l.b16 %v197
    %v480 = vunpack.c.h.b16 %v197
    %v481 = vunpack.c.l.b16 %v198
    %v482 = vunpack.c.h.b16 %v198
    %v483 = vunpack.c.l.b16 %v199
    %v484 = vunpack.c.l.b16 %v200
    %v485 = vunpack.c.h.b16 %v200
    %v486 = vunpack.c.l.b16 %v201
    %v487 = vunpack.c.h.b16 %v201
    %v488 = vunpack.c.l.b16 %v202
    %v489 = vunpack.c.h.b16 %v202
    %v490 = vunpack.c.l.b16 %v203
    %v491 = vunpack.c.l.b16 %v204
    %v492 = vunpack.c.h.b16 %v204
    %v493 = vunpack.c.l.b16 %v205
    %v494 = vunpack.c.h.b16 %v205
    %v495 = vunpack.c.l.b16 %v206
    %v496 = vunpack.c.h.b16 %v206
    %v497 = vunpack.c.l.b16 %v207
    %v498 = vunpack.c.l.b16 %v208
    %v499 = vunpack.c.h.b16 %v208
    %v500 = vunpack.c.l.b16 %v209
    %v501 = vunpack.c.h.b16 %v209
    %v502 = vunpack.c.l.b16 %v210
    %v503 = vunpack.c.h.b16 %v210
    %v504 = vunpack.c.l.b16 %v211
    %v505 = vunpack.c.l.b16 %v212
    %v506 = vunpack.c.h.b16 %v212
    %v507 = vunpack.c.l.b16 %v213
    %v508 = vunpack.c.h.b16 %v213
    %v509 = vunpack.c.l.b16 %v214
    %v510 = vunpack.c.h.b16 %v214
    %v511 = vunpack.c.l.b16 %v215
    %v512 = vunpack.c.l.b16 %v216
    %v513 = vunpack.c.h.b16 %v216
    %v514 = vunpack.c.l.b16 %v217
    %v515 = vunpack.c.h.b16 %v217
    %v516 = vunpack.c.l.b16 %v218
    %v517 = vunpack.c.h.b16 %v218
    %v518 = vunpack.c.l.b16 %v219
    %v519 = vunpack.c.l.b16 %v220
    %v520 = vunpack.c.h.b16 %v220
    %v521 = vunpack.c.l.b16 %v221
    %v522 = vunpack.c.h.b16 %v221
    %v523 = vunpack.c.l.b16 %v222
    %v524 = vunpack.c.h.b16 %v222
    %v525 = vunpack.c.l.b16 %v223
    %v526 = vunpack.c.l.b16 %v224
    %v527 = vunpack.c.h.b16 %v224
    %v528 = vunpack.c.l.b16 %v225
    %v529 = vunpack.c.h.b16 %v225
    %v530 = vunpack.c.l.b16 %v226
    %v531 = vunpack.c.h.b16 %v226
    %v532 = vunpack.c.l.b16 %v227
    %v533 = vunpack.c.l.b16 %v228
    %v534 = vunpack.c.h.b16 %v228
    %v535 = vunpack.c.l.b16 %v229
    %v536 = vunpack.c.h.b16 %v229
    %v537 = vunpack.c.l.b16 %v230
    %v538 = vunpack.c.h.b16 %v230
    %v539 = vunpack.c.l.b16 %v231
    %v540 = vunpack.c.l.b16 %v232
    %v541 = vunpack.c.h.b16 %v232
    %v542 = vunpack.c.l.b16 %v233
    %v543 = vunpack.c.h.b16 %v233
    %v544 = vunpack.c.l.b16 %v234
    %v545 = vunpack.c.h.b16 %v234
    %v546 = vunpack.c.l.b16 %v235
    %v547 = vunpack.c.l.b16 %v236
    %v548 = vunpack.c.h.b16 %v236
    %v549 = vunpack.c.l.b16 %v237
    %v550 = vunpack.c.h.b16 %v237
    %v551 = vunpack.c.l.b16 %v238
    %v552 = vunpack.c.h.b16 %v238
    %v553 = vunpack.c.l.b16 %v239
    %v554 = vunpack.c.l.b16 %v240
    %v555 = vunpack.c.h.b16 %v240
    %v556 = vunpack.c.l.b16 %v241
    %v557 = vunpack.c.h.b16 %v241
    %v558 = vunpack.c.l.b16 %v242
    %v559 = vunpack.c.h.b16 %v242
    %v560 = vunpack.c.l.b16 %v243
    %v561 = vunpack.c.l.b16 %v244
    %v562 = vunpack.c.h.b16 %v244
    %v563 = vunpack.c.l.b16 %v245
    %v564 = vunpack.c.h.b16 %v245
    %v565 = vunpack.c.l.b16 %v246
    %v566 = vunpack.c.h.b16 %v246
    %v567 = vunpack.c.l.b16 %v247
    %v568 = vunpack.c.l.b16 %v248
    %v569 = vunpack.c.h.b16 %v248
    %v570 = vunpack.c.l.b16 %v249
    %v571 = vunpack.c.h.b16 %v249
    %v572 = vunpack.c.l.b16 %v250
    %v573 = vunpack.c.h.b16 %v250
    %v574 = vunpack.c.l.b16 %v251
    %v575 = vunpack.c.l.b16 %v252
    %v576 = vunpack.c.h.b16 %v252
    %v577 = vunpack.c.l.b16 %v253
    %v578 = vunpack.c.h.b16 %v253
    %v579 = vunpack.c.l.b16 %v254
    %v580 = vunpack.c.h.b16 %v254
    %v581 = vunpack.c.l.b16 %v255
    %v582 = vunpack.c.l.b16 %v256
    %v583 = vunpack.c.h.b16 %v256
    %v584 = vunpack.c.l.b16 %v257
    %v585 = vunpack.c.h.b16 %v257
    %v586 = vunpack.c.l.b16 %v258
    %v587 = vunpack.c.h.b16 %v258
    %v588 = vunpack.c.l.b16 %v259
    %v589 = vunpack.c.l.b16 %v260
    %v590 = vunpack.c.h.b16 %v260
    %v591 = vunpack.c.l.b16 %v261
    %v592 = vunpack.c.h.b16 %v261
    %v593 = vunpack.c.l.b16 %v262
    %v594 = vunpack.c.h.b16 %v262
    %v595 = vunpack.c.l.b16 %v263
    %v596 = vunpack.c.l.b16 %v264
    %v597 = vunpack.c.h.b16 %v264
    %v598 = vunpack.c.l.b16 %v265
    %v599 = vunpack.c.h.b16 %v265
    %v600 = vunpack.c.l.b16 %v266
    %v601 = vunpack.c.h.b16 %v266
    %v602 = vunpack.c.l.b16 %v267
    %v603 = vunpack.c.l.b16 %v268
    %v604 = vunpack.c.h.b16 %v268
    %v605 = vunpack.c.l.b16 %v269
    %v606 = vunpack.c.h.b16 %v269
    %v607 = vunpack.c.l.b16 %v270
    %v608 = vunpack.c.h.b16 %v270
    %v609 = vunpack.c.l.b16 %v271
    %v610 = vunpack.c.l.b16 %v272
    %v611 = vunpack.c.h.b16 %v272
    %v612 = vunpack.c.l.b16 %v273
    %v613 = vunpack.c.h.b16 %v273
    %v614 = vunpack.c.l.b16 %v274
    %v615 = vunpack.c.h.b16 %v274
    %v616 = vunpack.c.l.b16 %v275
    %v617 = vunpack.c.l.b16 %v276
    %v618 = vunpack.c.h.b16 %v276
    %v619 = vunpack.c.l.b16 %v277
    %v620 = vunpack.c.h.b16 %v277
    %v621 = vunpack.c.l.b16 %v278
    %v622 = vunpack.c.h.b16 %v278
    %v623 = vunpack.c.l.b16 %v279
    %v624 = vunpack.c.l.b16 %v280
    %v625 = vunpack.c.h.b16 %v280
    %v626 = vunpack.c.l.b16 %v281
    %v627 = vunpack.c.h.b16 %v281
    %v628 = vunpack.c.l.b16 %v282
    %v629 = vunpack.c.h.b16 %v282
    %v630 = vunpack.c.l.b16 %v283
    %v631 = vunpack.c.l.b16 %v284
    %v632 = vunpack.c.h.b16 %v284
    %v633 = vunpack.c.l.b16 %v285
    %v634 = vunpack.c.h.b16 %v285
    %v635 = vunpack.c.l.b16 %v286
    %v636 = vunpack.c.h.b16 %v286
    %v637 = vunpack.c.l.b16 %v287
    %v638 = vunpack.c.l.b16 %v288
    %v639 = vunpack.c.h.b16 %v288
    %v640 = vunpack.c.l.b16 %v289
    %v641 = vunpack.c.h.b16 %v289
    %v642 = vunpack.c.l.b16 %v290
    %v643 = vunpack.c.h.b16 %v290
    %v644 = vunpack.c.l.b16 %v291
    %v645 = vunpack.c.l.b16 %v292
    %v646 = vunpack.c.h.b16 %v292
    %v647 = vunpack.c.l.b16 %v293
    %v648 = vunpack.c.h.b16 %v293
    %v649 = vunpack.c.l.b16 %v294
    %v650 = vunpack.c.h.b16 %v294
    %v651 = vunpack.c.l.b16 %v295
    %v652 = vunpack.c.l.b16 %v296
    %v653 = vunpack.c.h.b16 %v296
    %v654 = vunpack.c.l.b16 %v297
    %v655 = vunpack.c.h.b16 %v297
    %v656 = vunpack.c.l.b16 %v298
    %v657 = vunpack.c.h.b16 %v298
    %v658 = vunpack.c.l.b16 %v299
    %v659 = vunpack.c.l.b16 %v300
    %v660 = vunpack.c.h.b16 %v300
    %v661 = vunpack.c.l.b16 %v301
    %v662 = vunpack.c.h.b16 %v301
    %v663 = vunpack.c.l.b16 %v302
    %v664 = vunpack.c.h.b16 %v302
    %v665 = vunpack.c.l.b16 %v303
    %v666 = vunpack.c.l.b16 %v304
    %v667 = vunpack.c.h.b16 %v304
    %v668 = vunpack.c.l.b16 %v305
    %v669 = vunpack.c.h.b16 %v305
    %v670 = vunpack.c.l.b16 %v306
    %v671 = vunpack.c.h.b16 %v306
    %v672 = vunpack.c.l.b16 %v307
    %v673 = vunpack.c.l.b16 %v308
    %v674 = vunpack.c.h.b16 %v308
    %v675 = vunpack.c.l.b16 %v309
    %v676 = vunpack.c.h.b16 %v309
    %v677 = vunpack.c.l.b16 %v310
    %v678 = vunpack.c.h.b16 %v310
    %v679 = vunpack.c.l.b16 %v311
    %v680 = vpack.c.b16 %v463, %v456
    %v681 = vpack.c.b16 %v464, %v457
    %v682 = vpack.c.b16 %v465, %v458
    %v683 = vpack.c.b16 %v466, %v459
    %v684 = vpack.c.b16 %v467, %v460
    %v685 = vpack.c.b16 %v468, %v461
    %v686 = vpack.c.b16 %v469, %v462
    %v687 = vpack.c.b16 %v477, %v470
    %v688 = vpack.c.b16 %v478, %v471
    %v689 = vpack.c.b16 %v479, %v472
    %v690 = vpack.c.b16 %v480, %v473
    %v691 = vpack.c.b16 %v481, %v474
    %v692 = vpack.c.b16 %v482, %v475
    %v693 = vpack.c.b16 %v483, %v476
    %v694 = vpack.c.b16 %v491, %v484
    %v695 = vpack.c.b16 %v492, %v485
    %v696 = vpack.c.b16 %v493, %v486
    %v697 = vpack.c.b16 %v494, %v487
    %v698 = vpack.c.b16 %v495, %v488
    %v699 = vpack.c.b16 %v496, %v489
    %v700 = vpack.c.b16 %v497, %v490
    %v701 = vpack.c.b16 %v505, %v498
    %v702 = vpack.c.b16 %v506, %v499
    %v703 = vpack.c.b16 %v507, %v500
    %v704 = vpack.c.b16 %v508, %v501
    %v705 = vpack.c.b16 %v509, %v502
    %v706 = vpack.c.b16 %v510, %v503
    %v707 = vpack.c.b16 %v511, %v504
    %v708 = vpack.c.b16 %v519, %v512
    %v709 = vpack.c.b16 %v520, %v513
    %v710 = vpack.c.b16 %v521, %v514
    %v711 = vpack.c.b16 %v522, %v515
    %v712 = vpack.c.b16 %v523, %v516
    %v713 = vpack.c.b16 %v524, %v517
    %v714 = vpack.c.b16 %v525, %v518
    %v715 = vpack.c.b16 %v533, %v526
    %v716 = vpack.c.b16 %v534, %v527
    %v717 = vpack.c.b16 %v535, %v528
    %v718 = vpack.c.b16 %v536, %v529
    %v719 = vpack.c.b16 %v537, %v530
    %v720 = vpack.c.b16 %v538, %v531
    %v721 = vpack.c.b16 %v539, %v532
    %v722 = vpack.c.b16 %v547, %v540
    %v723 = vpack.c.b16 %v548, %v541
    %v724 = vpack.c.b16 %v549, %v542
    %v725 = vpack.c.b16 %v550, %v543
    %v726 = vpack.c.b16 %v551, %v544
    %v727 = vpack.c.b16 %v552, %v545
    %v728 = vpack.c.b16 %v553, %v546
    %v729 = vpack.c.b16 %v561, %v554
    %v730 = vpack.c.b16 %v562, %v555
    %v731 = vpack.c.b16 %v563, %v556
    %v732 = vpack.c.b16 %v564, %v557
    %v733 = vpack.c.b16 %v565, %v558
    %v734 = vpack.c.b16 %v566, %v559
    %v735 = vpack.c.b16 %v567, %v560
    %v736 = vpack.c.b16 %v575, %v568
    %v737 = vpack.c.b16 %v576, %v569
    %v738 = vpack.c.b16 %v577, %v570
    %v739 = vpack.c.b16 %v578, %v571
    %v740 = vpack.c.b16 %v579, %v572
    %v741 = vpack.c.b16 %v580, %v573
    %v742 = vpack.c.b16 %v581, %v574
    %v743 = vpack.c.b16 %v589, %v582
    %v744 = vpack.c.b16 %v590, %v583
    %v745 = vpack.c.b16 %v591, %v584
    %v746 = vpack.c.b16 %v592, %v585
    %v747 = vpack.c.b16 %v593, %v586
    %v748 = vpack.c.b16 %v594, %v587
    %v749 = vpack.c.b16 %v595, %v588
    %v750 = vpack.c.b16 %v603, %v596
    %v751 = vpack.c.b16 %v604, %v597
    %v752 = vpack.c.b16 %v605, %v598
    %v753 = vpack.c.b16 %v606, %v599
    %v754 = vpack.c.b16 %v607, %v600
    %v755 = vpack.c.b16 %v608, %v601
    %v756 = vpack.c.b16 %v609, %v602
    %v757 = vpack.c.b16 %v617, %v610
    %v758 = vpack.c.b16 %v618, %v611
    %v759 = vpack.c.b16 %v619, %v612
    %v760 = vpack.c.b16 %v620, %v613
    %v761 = vpack.c.b16 %v621, %v614
    %v762 = vpack.c.b16 %v622, %v615
    %v763 = vpack.c.b16 %v623, %v616
    %v764 = vpack.c.b16 %v631, %v624
    %v765 = vpack.c.b16 %v632, %v625
    %v766 = vpack.c.b16 %v633, %v626
    %v767 = vpack.c.b16 %v634, %v627
    %v768 = vpack.c.b16 %v635, %v628
    %v769 = vpack.c.b16 %v636, %v629
    %v770 = vpack.c.b16 %v637, %v630
    %v771 = vpack.c.b16 %v645, %v638
    %v772 = vpack.c.b16 %v646, %v639
    %v773 = vpack.c.b16 %v647, %v640
    %v774 = vpack.c.b16 %v648, %v641
    %v775 = vpack.c.b16 %v649, %v642
    %v776 = vpack.c.b16 %v650, %v643
    %v777 = vpack.c.b16 %v651, %v644
    %v778 = vpack.c.b16 %v659, %v652
    %v779 = vpack.c.b16 %v660, %v653
    %v780 = vpack.c.b16 %v661, %v654
    %v781 = vpack.c.b16 %v662, %v655
    %v782 = vpack.c.b16 %v663, %v656
    %v783 = vpack.c.b16 %v664, %v657
    %v784 = vpack.c.b16 %v665, %v658
    %v785 = vpack.c.b16 %v673, %v666
    %v786 = vpack.c.b16 %v674, %v667
    %v787 = vpack.c.b16 %v675, %v668
    %v788 = vpack.c.b16 %v676, %v669
    %v789 = vpack.c.b16 %v677, %v670
    %v790 = vpack.c.b16 %v678, %v671
    %v791 = vpack.c.b16 %v679, %v672
    %904 = vmatpush.bf16.msra.mxu0 %v729
    %905 = vmatpush.bf16.msra.mxu0 %v722
    %906 = vmatpush.bf16.msra.mxu0 %v715
    %907 = vmatpush.bf16.msra.mxu0 %v708
    %908 = vmatpush.bf16.msra.mxu0 %v701
    %909 = vmatpush.bf16.msra.mxu0 %v694
    %910 = vmatpush.bf16.msra.mxu0 %v687
    %911 = vmatpush.bf16.msra.mxu0 %v680
    %912 = vmatmul.bf16.gmra.mxu0 %v182
    %v913 = vpop.f32.mrf.mxu0
    %v914 = vadd.f32 %v314, %v913
    %v915 = vpop.f32.mrf.mxu0
    %916 = vdwg.mxu0
    %917 = vmatpush.bf16.msra.mxu0 %v785
    %918 = vmatpush.bf16.msra.mxu0 %v778
    %919 = vmatpush.bf16.msra.mxu0 %v771
    %920 = vmatpush.bf16.msra.mxu0 %v764
    %921 = vmatpush.bf16.msra.mxu0 %v757
    %922 = vmatpush.bf16.msra.mxu0 %v750
    %923 = vmatpush.bf16.msra.mxu0 %v743
    %924 = vmatpush.bf16.msra.mxu0 %v736
    %925 = vmatmul.bf16.gmra.mxu0 %v183
    %v926 = vpop.f32.mrf.mxu0
    %v927 = vadd.f32 %v914, %v926
    %v928 = vpop.f32.mrf.mxu0
    %929 = vdwg.mxu0
    %930 = vmatpush.bf16.msra.mxu0 %v730
    %931 = vmatpush.bf16.msra.mxu0 %v723
    %932 = vmatpush.bf16.msra.mxu0 %v716
    %933 = vmatpush.bf16.msra.mxu0 %v709
    %934 = vmatpush.bf16.msra.mxu0 %v702
    %935 = vmatpush.bf16.msra.mxu0 %v695
    %936 = vmatpush.bf16.msra.mxu0 %v688
    %937 = vmatpush.bf16.msra.mxu0 %v681
    %938 = vmatmul.bf16.gmra.mxu0 %v182
    %v939 = vpop.f32.mrf.mxu0
    %v940 = vadd.f32 %v315, %v939
    %v941 = vpop.f32.mrf.mxu0
    %942 = vdwg.mxu0
    %943 = vmatpush.bf16.msra.mxu0 %v786
    %944 = vmatpush.bf16.msra.mxu0 %v779
    %945 = vmatpush.bf16.msra.mxu0 %v772
    %946 = vmatpush.bf16.msra.mxu0 %v765
    %947 = vmatpush.bf16.msra.mxu0 %v758
    %948 = vmatpush.bf16.msra.mxu0 %v751
    %949 = vmatpush.bf16.msra.mxu0 %v744
    %950 = vmatpush.bf16.msra.mxu0 %v737
    %951 = vmatmul.bf16.gmra.mxu0 %v183
    %v952 = vpop.f32.mrf.mxu0
    %v953 = vadd.f32 %v940, %v952
    %v954 = vpop.f32.mrf.mxu0
    %955 = vdwg.mxu0
    %956 = vmatpush.bf16.msra.mxu0 %v731
    %957 = vmatpush.bf16.msra.mxu0 %v724
    %958 = vmatpush.bf16.msra.mxu0 %v717
    %959 = vmatpush.bf16.msra.mxu0 %v710
    %960 = vmatpush.bf16.msra.mxu0 %v703
    %961 = vmatpush.bf16.msra.mxu0 %v696
    %962 = vmatpush.bf16.msra.mxu0 %v689
    %963 = vmatpush.bf16.msra.mxu0 %v682
    %964 = vmatmul.bf16.gmra.mxu0 %v182
    %v965 = vpop.f32.mrf.mxu0
    %v966 = vadd.f32 %v316, %v965
    %v967 = vpop.f32.mrf.mxu0
    %968 = vdwg.mxu0
    %969 = vmatpush.bf16.msra.mxu0 %v787
    %970 = vmatpush.bf16.msra.mxu0 %v780
    %971 = vmatpush.bf16.msra.mxu0 %v773
    %972 = vmatpush.bf16.msra.mxu0 %v766
    %973 = vmatpush.bf16.msra.mxu0 %v759
    %974 = vmatpush.bf16.msra.mxu0 %v752
    %975 = vmatpush.bf16.msra.mxu0 %v745
    %976 = vmatpush.bf16.msra.mxu0 %v738
    %977 = vmatmul.bf16.gmra.mxu0 %v183
    %v978 = vpop.f32.mrf.mxu0
    %v979 = vadd.f32 %v966, %v978
    %v980 = vpop.f32.mrf.mxu0
    %981 = vdwg.mxu0
    %982 = vmatpush.bf16.msra.mxu0 %v732
    %983 = vmatpush.bf16.msra.mxu0 %v725
    %984 = vmatpush.bf16.msra.mxu0 %v718
    %985 = vmatpush.bf16.msra.mxu0 %v711
    %986 = vmatpush.bf16.msra.mxu0 %v704
    %987 = vmatpush.bf16.msra.mxu0 %v697
    %988 = vmatpush.bf16.msra.mxu0 %v690
    %989 = vmatpush.bf16.msra.mxu0 %v683
    %990 = vmatmul.bf16.gmra.mxu0 %v182
    %v991 = vpop.f32.mrf.mxu0
    %v992 = vadd.f32 %v317, %v991
    %v993 = vpop.f32.mrf.mxu0
    %994 = vdwg.mxu0
    %995 = vmatpush.bf16.msra.mxu0 %v788
    %996 = vmatpush.bf16.msra.mxu0 %v781
    %997 = vmatpush.bf16.msra.mxu0 %v774
    %998 = vmatpush.bf16.msra.mxu0 %v767
    %999 = vmatpush.bf16.msra.mxu0 %v760
    %1000 = vmatpush.bf16.msra.mxu0 %v753
    %1001 = vmatpush.bf16.msra.mxu0 %v746
    %1002 = vmatpush.bf16.msra.mxu0 %v739
    %1003 = vmatmul.bf16.gmra.mxu0 %v183
    %v1004 = vpop.f32.mrf.mxu0
    %v1005 = vadd.f32 %v992, %v1004
    %v1006 = vpop.f32.mrf.mxu0
    %1007 = vdwg.mxu0
    %1008 = vmatpush.bf16.msra.mxu0 %v733
    %1009 = vmatpush.bf16.msra.mxu0 %v726
    %1010 = vmatpush.bf16.msra.mxu0 %v719
    %1011 = vmatpush.bf16.msra.mxu0 %v712
    %1012 = vmatpush.bf16.msra.mxu0 %v705
    %1013 = vmatpush.bf16.msra.mxu0 %v698
    %1014 = vmatpush.bf16.msra.mxu0 %v691
    %1015 = vmatpush.bf16.msra.mxu0 %v684
    %1016 = vmatmul.bf16.gmra.mxu0 %v182
    %v1017 = vpop.f32.mrf.mxu0
    %v1018 = vadd.f32 %v318, %v1017
    %v1019 = vpop.f32.mrf.mxu0
    %1020 = vdwg.mxu0
    %1021 = vmatpush.bf16.msra.mxu0 %v789
    %1022 = vmatpush.bf16.msra.mxu0 %v782
    %1023 = vmatpush.bf16.msra.mxu0 %v775
    %1024 = vmatpush.bf16.msra.mxu0 %v768
    %1025 = vmatpush.bf16.msra.mxu0 %v761
    %1026 = vmatpush.bf16.msra.mxu0 %v754
    %1027 = vmatpush.bf16.msra.mxu0 %v747
    %1028 = vmatpush.bf16.msra.mxu0 %v740
    %1029 = vmatmul.bf16.gmra.mxu0 %v183
    %v1030 = vpop.f32.mrf.mxu0
    %v1031 = vadd.f32 %v1018, %v1030
    %v1032 = vpop.f32.mrf.mxu0
    %1033 = vdwg.mxu0
    %1034 = vmatpush.bf16.msra.mxu0 %v734
    %1035 = vmatpush.bf16.msra.mxu0 %v727
    %1036 = vmatpush.bf16.msra.mxu0 %v720
    %1037 = vmatpush.bf16.msra.mxu0 %v713
    %1038 = vmatpush.bf16.msra.mxu0 %v706
    %1039 = vmatpush.bf16.msra.mxu0 %v699
    %1040 = vmatpush.bf16.msra.mxu0 %v692
    %1041 = vmatpush.bf16.msra.mxu0 %v685
    %1042 = vmatmul.bf16.gmra.mxu0 %v182
    %v1043 = vpop.f32.mrf.mxu0
    %v1044 = vadd.f32 %v319, %v1043
    %v1045 = vpop.f32.mrf.mxu0
    %1046 = vdwg.mxu0
    %1047 = vmatpush.bf16.msra.mxu0 %v790
    %1048 = vmatpush.bf16.msra.mxu0 %v783
    %1049 = vmatpush.bf16.msra.mxu0 %v776
    %1050 = vmatpush.bf16.msra.mxu0 %v769
    %1051 = vmatpush.bf16.msra.mxu0 %v762
    %1052 = vmatpush.bf16.msra.mxu0 %v755
    %1053 = vmatpush.bf16.msra.mxu0 %v748
    %1054 = vmatpush.bf16.msra.mxu0 %v741
    %1055 = vmatmul.bf16.gmra.mxu0 %v183
    %v1056 = vpop.f32.mrf.mxu0
    %v1057 = vadd.f32 %v1044, %v1056
    %v1058 = vpop.f32.mrf.mxu0
    %1059 = vdwg.mxu0
    %1060 = vmatpush.bf16.msra.mxu0 %v735
    %1061 = vmatpush.bf16.msra.mxu0 %v728
    %1062 = vmatpush.bf16.msra.mxu0 %v721
    %1063 = vmatpush.bf16.msra.mxu0 %v714
    %1064 = vmatpush.bf16.msra.mxu0 %v707
    %1065 = vmatpush.bf16.msra.mxu0 %v700
    %1066 = vmatpush.bf16.msra.mxu0 %v693
    %1067 = vmatpush.bf16.msra.mxu0 %v686
    %1068 = vmatmul.bf16.gmra.mxu0 %v182
    %v1069 = vpop.f32.mrf.mxu0
    %v1070 = vadd.f32 %v320, %v1069
    %v1071 = vpop.f32.mrf.mxu0
    %1072 = vdwg.mxu0
    %1073 = vmatpush.bf16.msra.mxu0 %v791
    %1074 = vmatpush.bf16.msra.mxu0 %v784
    %1075 = vmatpush.bf16.msra.mxu0 %v777
    %1076 = vmatpush.bf16.msra.mxu0 %v770
    %1077 = vmatpush.bf16.msra.mxu0 %v763
    %1078 = vmatpush.bf16.msra.mxu0 %v756
    %1079 = vmatpush.bf16.msra.mxu0 %v749
    %1080 = vmatpush.bf16.msra.mxu0 %v742
    %1081 = vmatmul.bf16.gmra.mxu0 %v183
    %v1082 = vpop.f32.mrf.mxu0
    %v1083 = vadd.f32 %v1070, %v1082
    %v1084 = vpop.f32.mrf.mxu0
    %1085 = vdwg.mxu0
    %v1086 = vsub.f32 0.0, %v927
    %v1087 = vsub.f32 0.0, %v953
    %v1088 = vsub.f32 0.0, %v979
    %v1089 = vsub.f32 0.0, %v1005
    %v1090 = vsub.f32 0.0, %v1031
    %v1091 = vsub.f32 0.0, %v1057
    %v1092 = vsub.f32 0.0, %v1083
    %v1093 = vmul.f32 %v1086, 1.442695
    %v1094 = vpow.pop %v1093
    %v1095 = vmul.f32 %v1087, 1.442695
    %v1096 = vpow.pop %v1095
    %v1097 = vmul.f32 %v1088, 1.442695
    %v1098 = vpow.pop %v1097
    %v1099 = vmul.f32 %v1089, 1.442695
    %v1100 = vpow.pop %v1099
    %v1101 = vmul.f32 %v1090, 1.442695
    %v1102 = vpow.pop %v1101
    %v1103 = vmul.f32 %v1091, 1.442695
    %v1104 = vpow.pop %v1103
    %v1105 = vmul.f32 %v1092, 1.442695
    %v1106 = vpow.pop %v1105
    %v1107 = vadd.f32 %v1094, 1.0
    %v1108 = vadd.f32 %v1096, 1.0
    %v1109 = vadd.f32 %v1098, 1.0
    %v1110 = vadd.f32 %v1100, 1.0
    %v1111 = vadd.f32 %v1102, 1.0
    %v1112 = vadd.f32 %v1104, 1.0
    %v1113 = vadd.f32 %v1106, 1.0
    %v1114 = vrcp.pop %v1107
    %v1115 = vrcp.pop %v1108
    %v1116 = vrcp.pop %v1109
    %v1117 = vrcp.pop %v1110
    %v1118 = vrcp.pop %v1111
    %v1119 = vrcp.pop %v1112
    %v1120 = vrcp.pop %v1113
    %v1121 = vpack.c.bf16 %v1115, %v1114
    %v1122 = vpack.c.bf16 %v1117, %v1116
    %v1123 = vpack.c.bf16 %v1119, %v1118
    %v1124 = vpack.c.bf16 %v1120, %v1120
    %1125 = vst [vmem:[#allocation7] sm:$0xff] %v1121
    %1126 = vst [vmem:[#allocation7 + $0x8] sm:$0xff] %v1122
    %1127 = vst [vmem:[#allocation7 + $0x10] sm:$0xff] %v1123
    %1128 = vst [vmem:[#allocation7 + $0x18] sm:$0xf] %v1124
    // Predicated region
    $region30: #{generator_forward.1} parent=1 // pred_check
      _
    $region31: #{generator_forward.1} parent=1 // pred_check_branch
      %1130 = sbr.rel (0) target = $region33
    $region32: #{generator_forward.1} parent=1 // pred_region
      %1132 = vsyncadd [#allocation4], 0
      %s1134 = sshll.u32 [#allocation7], 4
      %s1135 = int_to_ptr.vmem [resolvable:$true] %s1134
      %s1136 = sshll.u32 %s5, 4
      %s1137 = int_to_ptr.hbm [resolvable:$true] %s1136
      %1139 = dma.vmem_to_hbm [thread:$0]  %s1135, 448, %s1137, [#allocation4]
    $region33: #{generator_forward.1} parent=1 // pred_fallthru
      _
    // Predicated region
    $region34: #{generator_forward.1} parent=1 // pred_check
      _
    $region35: #{generator_forward.1} parent=1 // pred_check_branch
      %1141 = sbr.rel (0) target = $region37
    $region36: #{generator_forward.1} parent=1 // pred_region
      %1143 = dma.done [#allocation4], 448
    $region37: #{generator_forward.1} parent=1 // pred_fallthru
      _
    %1144 = vsyncpa [#allocation3], 1
    %1145 = vsyncpa [#allocation6], 1
    %1146 = vsyncpa [#allocation4], 1

</llo_original>
